<compile_context>
chip_gen: v7x
topology: tpu7x:2x2x1
jax: 0.10.0
libtpu: 0.0.40
codegen_flags: <defaults>
</compile_context>

<pallas_src>
import functools

import numpy as np
import jax
import jax.numpy as jnp
from jax import lax
from jax.experimental import pallas as pl
from jax.experimental.pallas import tpu as pltpu

KPAD = 8        # lane padding of the fused coordinate/norm rows (MXU contraction dim)
BIG = 1e8       # sentinel squared-distance contribution for padded rows/cols


def _chamfer_block_kernel(nm_ref, a_ref, b_ref, out_ref, *, eblk, npad, mpad):
    """One block of `eblk` events per grid step.

    nm_ref : SMEM (E_pad, 2) int32 (scalar-prefetched): [n_gen, n_gt] per event.
    a_ref  : VMEM (eblk, npad, KPAD) fused gen rows  [-2x, 1, |x|^2, 0...] (sentinel-padded).
    b_ref  : VMEM (eblk, KPAD, mpad) fused gt cols   [ y, |y|^2, 1, 0...]  (sentinel-padded).
    out_ref: VMEM (8, 128) per-block losses; event e's loss in (row 0, lane e), zeros elsewhere.
    """
    blk = pl.program_id(0)
    lane = lax.broadcasted_iota(jnp.int32, (8, 128), 1)
    sub = lax.broadcasted_iota(jnp.int32, (8, 128), 0)
    row_ids = lax.broadcasted_iota(jnp.int32, (npad, 1), 0)
    col_ids = lax.broadcasted_iota(jnp.int32, (1, mpad), 1)

    def body(e, acc):
        n = nm_ref[blk * eblk + e, 0]
        m = nm_ref[blk * eblk + e, 1]
        # Single MXU pass yields d^2 = |x|^2 + |y|^2 - 2 x.y; sentinel lanes handle padding.
        d2 = lax.dot_general(a_ref[e], b_ref[e], (((1,), (0,)), ((), ())),
                             preferred_element_type=jnp.float32)          # (npad, mpad)
        d2 = jnp.maximum(d2, 0.0)
        min_per_gen = jnp.min(d2, axis=1, keepdims=True)   # nearest gt per gen point (npad, 1)
        min_per_gt = jnp.min(d2, axis=0, keepdims=True)    # nearest gen per gt point (1, mpad)
        sum_cd2 = jnp.sum(jnp.where(row_ids < n, jnp.sqrt(min_per_gen), 0.0))   # gen -> gt
        sum_cd1 = jnp.sum(jnp.where(col_ids < m, jnp.sqrt(min_per_gt), 0.0))    # gt -> gen
        nf = jnp.maximum(n, 1).astype(jnp.float32)
        mf = jnp.maximum(m, 1).astype(jnp.float32)
        # Matches the torch reference: sum(cd1) / N_gen + sum(cd2) / M_gt (cross divisors).
        # TODO(synk): an event with zero gt points would make the torch reference fail inside
        # knn; here such (padded or degenerate) events contribute 0 instead of inf/NaN.
        term = jnp.where((n > 0) & (m > 0), sum_cd1 / nf + sum_cd2 / mf, 0.0)
        return jnp.where((lane == e) & (sub == 0), term, acc)

    out_ref[...] = lax.fori_loop(0, eblk, body, jnp.zeros((8, 128), jnp.float32),
                                 unroll=True)


@functools.lru_cache(maxsize=None)
def _make_chamfer_call(num_blocks, eblk, npad, mpad):
    kernel = functools.partial(_chamfer_block_kernel, eblk=eblk, npad=npad, mpad=mpad)
    grid_spec = pltpu.PrefetchScalarGridSpec(
        num_scalar_prefetch=1,
        grid=(num_blocks,),
        in_specs=[
            pl.BlockSpec((eblk, npad, KPAD), lambda blk, nm: (blk, 0, 0)),  # fused gen rows
            pl.BlockSpec((eblk, KPAD, mpad), lambda blk, nm: (blk, 0, 0)),  # fused gt cols
        ],
        out_specs=pl.BlockSpec((None, 8, 128), lambda blk, nm: (blk, 0, 0)),
    )
    return pl.pallas_call(
        kernel,
        out_shape=jax.ShapeDtypeStruct((num_blocks, 8, 128), jnp.float32),
        grid_spec=grid_spec,
        compiler_params=pltpu.CompilerParams(dimension_semantics=("parallel",)),
    )


@functools.partial(jax.jit,
                   static_argnames=("e_pad", "npad", "mpad", "eblk", "num_blocks"))
def _batched_chamfer_loss(points_gen, gt_coords, ev_gen, pos_gen, ev_gt, pos_gt,
                          n_counts, m_counts, half,
                          *, e_pad, npad, mpad, eblk, num_blocks):
    """Sum of per-event chamfer losses for one 'GPU', in a single pallas_call."""
    x = points_gen.reshape(-1, 3).astype(jnp.float32)
    y = (gt_coords.reshape(-1, 3).astype(jnp.float32) - half) / half

    x2 = jnp.sum(x * x, axis=1, keepdims=True)
    y2 = jnp.sum(y * y, axis=1, keepdims=True)
    a_rows = jnp.concatenate(
        [-2.0 * x, jnp.ones_like(x2), x2, jnp.zeros((x.shape[0], KPAD - 5), jnp.float32)],
        axis=1)                                                     # (Ngen, KPAD)
    b_cols = jnp.concatenate(
        [y, y2, jnp.ones_like(y2), jnp.zeros((y.shape[0], KPAD - 5), jnp.float32)],
        axis=1)                                                     # (Ngt, KPAD)

    pad_a = jnp.array([0., 0., 0., 1., BIG, 0., 0., 0.], jnp.float32)
    pad_b = jnp.array([0., 0., 0., BIG, 1., 0., 0., 0.], jnp.float32)
    A = jnp.broadcast_to(pad_a, (e_pad, npad, KPAD)).at[ev_gen, pos_gen].set(
        a_rows, unique_indices=True)                                # (E_pad, NPAD, KPAD)
    B = jnp.broadcast_to(pad_b.reshape(1, KPAD, 1), (e_pad, KPAD, mpad)).at[
        ev_gt, :, pos_gt].set(b_cols, unique_indices=True)          # (E_pad, KPAD, MPAD)

    nm = jnp.zeros((e_pad, 2), jnp.int32)
    nm = nm.at[:n_counts.shape[0], 0].set(n_counts.astype(jnp.int32))
    nm = nm.at[:m_counts.shape[0], 1].set(m_counts.astype(jnp.int32))

    losses = _make_chamfer_call(num_blocks, eblk, npad, mpad)(nm, A, B)   # (blocks, 8, 128)
    return jnp.sum(losses[:, 0, :])


def _cumcount(ids, num_groups):
    """Occurrence index of each element within its group (vectorized)."""
    ids = np.asarray(ids, dtype=np.int64)
    if ids.size == 0:
        return np.zeros(0, dtype=np.int32)
    order = np.argsort(ids, kind="stable")
    sorted_ids = ids[order]
    starts = np.concatenate(([0], np.cumsum(np.bincount(sorted_ids, minlength=num_groups))))[:-1]
    within = np.arange(ids.shape[0], dtype=np.int64) - starts[sorted_ids]
    pos = np.empty_like(within)
    pos[order] = within
    return pos.astype(np.int32)


def _segment_events(batch_gen, batch_gt):
    """Vectorized host-side segmentation of gen/gt points into events present in batch_gen."""
    batch_gen = np.asarray(batch_gen).astype(np.int64).ravel()
    batch_gt = np.asarray(batch_gt).astype(np.int64).ravel()

    uniq, ev_gen = np.unique(batch_gen, return_inverse=True)
    E = int(uniq.shape[0])
    ev_gen = ev_gen.astype(np.int32)
    pos_gen = _cumcount(ev_gen, E)
    n_counts = np.bincount(ev_gen, minlength=E).astype(np.int32)

    keep = np.isin(batch_gt, uniq)
    gt_sel = np.nonzero(keep)[0].astype(np.int32)
    ev_gt = np.searchsorted(uniq, batch_gt[gt_sel]).astype(np.int32)
    pos_gt = _cumcount(ev_gt, E)
    m_counts = np.bincount(ev_gt, minlength=E).astype(np.int32)

    return ev_gen, pos_gen, n_counts, ev_gt, pos_gt, m_counts, gt_sel


def _round_up(v, mult):
    return ((int(v) + mult - 1) // mult) * mult


class ReconstructionLoss:
    """JAX/Pallas port of mlreco ReconstructionLoss (forward pass only)."""

    def __init__(self, cfg, name='vae_loss'):
        self.loss_config = cfg[name]
        self.bce_weight = self.loss_config.get('bce_weight', 1.0)   # unused in forward (as in reference)
        self.kld_weight = self.loss_config.get('kld_weight', 0.0)   # unused in forward (as in reference)
        self.layer = self.loss_config.get('layer', -1)
        self.spatial_size = self.loss_config.get('spatial_size', 256)

    def forward(self, out, label, weight=None):
        loss = jnp.float32(0.0)
        accuracy = 0
        count = 0
        num_gpus = len(out['latent'])
        assert num_gpus == len(label)
        half = float(self.spatial_size) / 2.0
        for i in range(num_gpus):
            points_gen = jnp.asarray(out['points_gen'][i], jnp.float32)
            batch_gen = out['batch'][i]
            _occupancy = out['occupancy'][i]            # pulled but unused, as in reference
            lbl = jnp.asarray(label[i], jnp.float32)
            batch_gt = np.asarray(lbl[:, 0]).astype(np.int64)

            (ev_gen, pos_gen, n_counts, ev_gt, pos_gt, m_counts, gt_sel) = \
                _segment_events(batch_gen, batch_gt)
            E = int(n_counts.shape[0])
            if E == 0:
                continue

            max_n = int(n_counts.max()) if n_counts.size else 0
            max_m = int(m_counts.max()) if m_counts.size else 0
            npad = max(8, _round_up(max(max_n, 1), 8))
            mpad = max(128, _round_up(max(max_m, 1), 128))
            # Event-block size: amortize grid overhead, but keep >= 2 parallel grid steps
            # when possible so both v7x TensorCores get work.
            eblk = 8 if E >= 16 else max(1, (E + 1) // 2)
            num_blocks = -(-E // eblk)
            e_pad = num_blocks * eblk

            gt_coords = lbl[:, 1:4][jnp.asarray(gt_sel)]
            loss = loss + _batched_chamfer_loss(
                points_gen, gt_coords,
                jnp.asarray(ev_gen), jnp.asarray(pos_gen),
                jnp.asarray(ev_gt), jnp.asarray(pos_gt),
                jnp.asarray(n_counts), jnp.asarray(m_counts),
                jnp.float32(half),
                e_pad=e_pad, npad=npad, mpad=mpad, eblk=eblk, num_blocks=num_blocks)
            count += E
        # TODO(synk): accuracy is never computed in the reference forward either; kept as 0.
        return {'accuracy': accuracy, 'loss': loss / count}


def _chamfer_reference(x, y):
    """Pure-numpy reference of the mlreco chamfer_distance (no subsampling)."""
    x = np.asarray(x, np.float64)
    y = np.asarray(y, np.float64)
    d = np.sqrt(np.maximum(((x[:, None, :] - y[None, :, :]) ** 2).sum(-1), 0.0))  # (N, M)
    cd1 = d.min(axis=0).sum()   # each gt point -> nearest gen point
    cd2 = d.min(axis=1).sum()   # each gen point -> nearest gt point
    return cd1 / x.shape[0] + cd2 / y.shape[0]


if __name__ == "__main__":
    key = jax.random.PRNGKey(0)
    k1, k2, k3 = jax.random.split(key, 3)

    cfg = {'vae_loss': {'bce_weight': 1.0, 'kld_weight': 0.0, 'spatial_size': 256}}
    criterion = ReconstructionLoss(cfg)

    # One "GPU", two events in the minibatch.
    n_gen_per_event = 48
    n_gt_per_event = 56
    num_events = 2

    # Generated points live in [-1, 1) (decoder output space).
    points_gen = jax.random.uniform(k1, (num_events * n_gen_per_event, 3),
                                    minval=-1.0, maxval=1.0, dtype=jnp.float32)
    batch_gen = jnp.repeat(jnp.arange(num_events, dtype=jnp.int32), n_gen_per_event)
    occupancy = jax.random.uniform(k3, (num_events * n_gen_per_event,), dtype=jnp.float32)
    latent = jnp.zeros((num_events, 32), jnp.float32)

    # label[i]: (N, batch_id + 3 coords + 1 class) = (N, 5), coords in voxel units [0, 256).
    gt_coords = jax.random.uniform(k2, (num_events * n_gt_per_event, 3),
                                   minval=0.0, maxval=256.0, dtype=jnp.float32)
    gt_batch = jnp.repeat(jnp.arange(num_events, dtype=jnp.float32), n_gt_per_event)[:, None]
    gt_class = jnp.zeros((num_events * n_gt_per_event, 1), jnp.float32)
    label0 = jnp.concatenate([gt_batch, gt_coords, gt_class], axis=1)

    out = {
        'latent': [latent],
        'points_gen': [points_gen],
        'batch': [batch_gen],
        'occupancy': [occupancy],
    }
    label = [label0]

    result = criterion.forward(out, label)
    loss = jax.block_until_ready(result['loss'])

    # Pure-numpy reference check (same per-event loop as the torch module).
    pg = np.asarray(points_gen)
    bg = np.asarray(batch_gen)
    lb = np.asarray(label0)
    half = 256.0 / 2.0
    ref_loss = 0.0
    cnt = 0
    for bidx in np.unique(bg):
        xs = pg[bg == bidx]
        ys = (lb[lb[:, 0].astype(np.int32) == int(bidx), 1:4] - half) / half
        ref_loss += _chamfer_reference(xs, ys)
        cnt += 1
    ref_loss /= cnt

    assert np.isfinite(float(loss))
    np.testing.assert_allclose(float(loss), float(ref_loss), rtol=5e-3, atol=5e-3)
    print("KERNEL_OK")
</pallas_src>

<mosaic_0001>
module attributes {stable_mosaic.version = 11 : i64} {
  func.func @_chamfer_block_kernel(%arg0: i32, %arg1: memref<2x2xi32, #tpu.memory_space<smem>>, %arg2: memref<1x48x8xf32, #tpu.memory_space<vmem>>, %arg3: memref<1x8x128xf32, #tpu.memory_space<vmem>>, %arg4: memref<1x8x128xf32, #tpu.memory_space<vmem>>) attributes {dimension_semantics = [#tpu.dimension_semantics<parallel>], iteration_bounds = array<i64: 2>, scalar_prefetch = 1 : i64, scratch_operands = 0 : i64, tpu.core_type = #tpu.core_type<tc>, window_params = [{transform_indices = @transform_0, window_bounds = array<i64: 1, 48, 8>}, {transform_indices = @transform_1, window_bounds = array<i64: 1, 8, 128>}, {transform_indices = @transform_2, window_bounds = array<i64: 1, 8, 128>}]} {
    %0 = tpu.iota {dimensions = array<i32: 1>} : vector<8x128xi32>
    %1 = tpu.iota {dimensions = array<i32: 0>} : vector<8x128xi32>
    %2 = tpu.iota {dimensions = array<i32: 0>} : vector<48x1xi32>
    %3 = tpu.iota {dimensions = array<i32: 1>} : vector<1x128xi32>
    %cst = arith.constant 0.000000e+00 : f32
    %4 = vector.broadcast %cst : f32 to vector<8x128xf32>
    %c0_i32 = arith.constant 0 : i32
    %c1_i32 = arith.constant 1 : i32
    %5 = arith.muli %arg0, %c1_i32 : i32
    %6 = arith.addi %5, %c0_i32 : i32
    %7 = arith.index_cast %6 : i32 to index
    %c0 = arith.constant 0 : index
    %8 = memref.load %arg1[%7, %c0] : memref<2x2xi32, #tpu.memory_space<smem>>
    %c1_i32_0 = arith.constant 1 : i32
    %9 = arith.muli %arg0, %c1_i32_0 : i32
    %10 = arith.addi %9, %c0_i32 : i32
    %11 = arith.index_cast %10 : i32 to index
    %c1 = arith.constant 1 : index
    %12 = memref.load %arg1[%11, %c1] : memref<2x2xi32, #tpu.memory_space<smem>>
    %13 = arith.index_cast %c0_i32 : i32 to index
    %c0_1 = arith.constant 0 : index
    %c0_2 = arith.constant 0 : index
    %14 = vector.load %arg2[%13, %c0_1, %c0_2] : memref<1x48x8xf32, #tpu.memory_space<vmem>>, vector<1x48x8xf32>
    %15 = vector.shape_cast %14 : vector<1x48x8xf32> to vector<48x8xf32>
    %16 = arith.index_cast %c0_i32 : i32 to index
    %c0_3 = arith.constant 0 : index
    %c0_4 = arith.constant 0 : index
    %17 = vector.load %arg3[%16, %c0_3, %c0_4] : memref<1x8x128xf32, #tpu.memory_space<vmem>>, vector<1x8x128xf32>
    %18 = vector.shape_cast %17 : vector<1x8x128xf32> to vector<8x128xf32>
    %cst_5 = arith.constant dense<0.000000e+00> : vector<48x128xf32>
    %19 = tpu.matmul %15, %18, %cst_5 {dimension_numbers = #tpu.dot_dimension_numbers<[1], [0], [0], [1], [0, 0, 1, 1], [], []>} : vector<48x8xf32>, vector<8x128xf32>, vector<48x128xf32> -> vector<48x128xf32>
    %cst_6 = arith.constant 0.000000e+00 : f32
    %20 = vector.broadcast %cst_6 : f32 to vector<48x128xf32>
    %21 = arith.maximumf %19, %20 : vector<48x128xf32>
    %cst_7 = arith.constant dense<0x7F800000> : vector<48xf32>
    %22 = vector.multi_reduction <minimumf>, %21, %cst_7 [1] : vector<48x128xf32> to vector<48xf32>
    %23 = vector.shape_cast %22 : vector<48xf32> to vector<48x1xf32>
    %cst_8 = arith.constant dense<0x7F800000> : vector<128xf32>
    %24 = vector.multi_reduction <minimumf>, %21, %cst_8 [0] : vector<48x128xf32> to vector<128xf32>
    %25 = vector.shape_cast %24 : vector<128xf32> to vector<1x128xf32>
    %26 = vector.broadcast %8 : i32 to vector<48x1xi32>
    %27 = arith.cmpi slt, %2, %26 : vector<48x1xi32>
    %28 = math.sqrt %23 : vector<48x1xf32>
    %cst_9 = arith.constant 0.000000e+00 : f32
    %29 = vector.broadcast %cst_9 : f32 to vector<48x1xf32>
    %30 = arith.select %27, %28, %29 : vector<48x1xi1>, vector<48x1xf32>
    %31 = vector.shape_cast %30 : vector<48x1xf32> to vector<1x48x1xf32>
    %cst_10 = arith.constant dense<0.000000e+00> : vector<1xf32>
    %32 = vector.multi_reduction <add>, %31, %cst_10 [1, 2] : vector<1x48x1xf32> to vector<1xf32>
    %33 = vector.shape_cast %32 : vector<1xf32> to vector<1x1x1xf32>
    %34 = vector.extract %33[0, 0, 0] : f32 from vector<1x1x1xf32>
    %35 = vector.broadcast %12 : i32 to vector<1x128xi32>
    %36 = arith.cmpi slt, %3, %35 : vector<1x128xi32>
    %37 = math.sqrt %25 : vector<1x128xf32>
    %cst_11 = arith.constant 0.000000e+00 : f32
    %38 = vector.broadcast %cst_11 : f32 to vector<1x128xf32>
    %39 = arith.select %36, %37, %38 : vector<1x128xi1>, vector<1x128xf32>
    %40 = vector.shape_cast %39 : vector<1x128xf32> to vector<1x1x128xf32>
    %cst_12 = arith.constant dense<0.000000e+00> : vector<1xf32>
    %41 = vector.multi_reduction <add>, %40, %cst_12 [1, 2] : vector<1x1x128xf32> to vector<1xf32>
    %42 = vector.shape_cast %41 : vector<1xf32> to vector<1x1x1xf32>
    %43 = vector.extract %42[0, 0, 0] : f32 from vector<1x1x1xf32>
    %c1_i32_13 = arith.constant 1 : i32
    %44 = arith.maxsi %8, %c1_i32_13 : i32
    %45 = arith.sitofp %44 : i32 to f32
    %c1_i32_14 = arith.constant 1 : i32
    %46 = arith.maxsi %12, %c1_i32_14 : i32
    %47 = arith.sitofp %46 : i32 to f32
    %c0_i32_15 = arith.constant 0 : i32
    %48 = arith.cmpi sgt, %8, %c0_i32_15 : i32
    %c0_i32_16 = arith.constant 0 : i32
    %49 = arith.cmpi sgt, %12, %c0_i32_16 : i32
    %50 = arith.andi %48, %49 : i1
    %51 = arith.divf %43, %45 : f32
    %52 = arith.divf %34, %47 : f32
    %53 = arith.addf %51, %52 : f32
    %cst_17 = arith.constant 0.000000e+00 : f32
    %54 = arith.select %50, %53, %cst_17 : f32
    %55 = vector.broadcast %c0_i32 : i32 to vector<8x128xi32>
    %56 = arith.cmpi eq, %0, %55 : vector<8x128xi32>
    %c0_i32_18 = arith.constant 0 : i32
    %57 = vector.broadcast %c0_i32_18 : i32 to vector<8x128xi32>
    %58 = arith.cmpi eq, %1, %57 : vector<8x128xi32>
    %59 = arith.andi %56, %58 : vector<8x128xi1>
    %60 = vector.broadcast %54 : f32 to vector<8x128xf32>
    %61 = arith.select %59, %60, %4 : vector<8x128xi1>, vector<8x128xf32>
    %c1_i32_19 = arith.constant 1 : i32
    %c0_20 = arith.constant 0 : index
    %c0_21 = arith.constant 0 : index
    %c0_22 = arith.constant 0 : index
    %62 = vector.load %arg4[%c0_20, %c0_21, %c0_22] : memref<1x8x128xf32, #tpu.memory_space<vmem>>, vector<1x8x128xf32>
    %63 = vector.shape_cast %62 : vector<1x8x128xf32> to vector<8x128xf32>
    %64 = vector.shape_cast %61 : vector<8x128xf32> to vector<1x8x128xf32>
    tpu.vector_store %arg4[%c0_20, %c0_21, %c0_22], %64 {strides = array<i32>} : memref<1x8x128xf32, #tpu.memory_space<vmem>>, vector<1x8x128xf32>,
    return
  }
  func.func @transform_0(%arg0: i32, %arg1: memref<2x2xi32, #tpu.memory_space<smem>>) -> (i32, i32, i32) {
    %c0_i32 = arith.constant 0 : i32
    %c0_i32_0 = arith.constant 0 : i32
    %c0_i32_1 = arith.constant 0 : i32
    return %arg0, %c0_i32, %c0_i32_0 : i32, i32, i32
  }
  func.func @transform_1(%arg0: i32, %arg1: memref<2x2xi32, #tpu.memory_space<smem>>) -> (i32, i32, i32) {
    %c0_i32 = arith.constant 0 : i32
    %c0_i32_0 = arith.constant 0 : i32
    %c0_i32_1 = arith.constant 0 : i32
    return %arg0, %c0_i32, %c0_i32_0 : i32, i32, i32
  }
  func.func @transform_2(%arg0: i32, %arg1: memref<2x2xi32, #tpu.memory_space<smem>>) -> (i32, i32, i32) {
    %c0_i32 = arith.constant 0 : i32
    %c0_i32_0 = arith.constant 0 : i32
    %c0_i32_1 = arith.constant 0 : i32
    return %arg0, %c0_i32, %c0_i32_0 : i32, i32, i32
  }
}

</mosaic_0001>

<llo_original>
// kernel: _batched_chamfer_loss.1
$region0: #{_batched_chamfer_loss.1}
  #allocation0 [shape = 'u32[]', space=smem, size = 0x4, offset = 0x4, fixed_abs, tag = 'smem constant byte address 0x4 - core index']
  #allocation1 [shape = 'u32[144,128]{1,0:T(1,128)}', space=vmem, size = 0x12000, scoped, tag = 'internal scratch']
  #allocation2 [shape = 's32[1]{0}', space=sflag, size = 0x4, scoped, tag = 'scoped memory for _batched_chamfer_loss.1']
  #allocation3 [shape = 'u8[1024]{0}', space=smem, size = 0x400, scoped, tag = 'prefetched SMEM operand 0']
  %s0 = inlined_call_operand.vmem [shape: s32[2,2], index: 0, kind: input, shape index: {}]
  %s1 = inlined_call_operand.vmem [shape: f32[2,48,8], index: 1, kind: input, shape index: {}]
  %s2 = inlined_call_operand.vmem [shape: f32[2,8,128], index: 2, kind: input, shape index: {}]
  %s3 = inlined_call_operand.vmem [shape: f32[2,8,128], index: 3, kind: output, shape index: {}]
  %s4 = sld [smem:[#allocation0]]
  $region41: #{_batched_chamfer_loss.1} parent=0
    _
  %s6 = ssub.s32 1, %s4
  %s7 = scalar_select 0, %s6, %s4
  %s8 = sshll.u32 %s0, 4
  %s9 = int_to_ptr.vmem [resolvable:$true] %s8
  %11 = dma.vmem_to_smem %s9, 32, [#allocation3], [#allocation2]
  %12 = dma.done [#allocation2], 32
  %13 = sfence
  loop: start=0, step=1, limit=4
  $region2: #{_batched_chamfer_loss.1} parent=0 // loop_pre_header
    _
  $region3: #{_batched_chamfer_loss.1} parent=0 // loop_header
    %s15 = sphi 0, %s19
    %p16 = scmp.ge.s32.totalorder %s15, 4
    %s25 = sphi 0, %s27
    %s28 = sphi 0, %s25
    %s29 = sphi 0, %s28
    %s45 = sphi 0, %s29
    %s51 = sphi 0, %s53
    %s54 = sphi 0, %s51
    %s55 = sphi 0, %s54
    %s71 = sphi 0, %s55
    %s77 = sphi 0, %s79
    %s80 = sphi 0, %s77
    %s81 = sphi 0, %s80
    %s97 = sphi 0, %s81
  $region4: #{_batched_chamfer_loss.1} parent=0 // loop_header_branch
    %18 = sbr.rel (%p16) target = $region8
  $region5: #{_batched_chamfer_loss.1} parent=0 // loop_body
    %s20 = ssub.s32 %s15, 1
    %s21 = ssub.s32 %s15, 2
    %s22 = sadd.s32 %s15, 1
    %s23 = ssub.s32 %s15, %s22
    %p24 = scmp.eq.s32.totalorder %s23, 0
    %s26 = sadd.s32 %s25, 1
    %s27 = scalar_select %p24, %s25, %s26
    %p30 = pneg %p24
    %p31 = scmp.eq.s32.totalorder %s15, 1
    %p32 = por %p30, %p31
    %p33 = scmp.ne.s32.totalorder %s25, %s28
    %p34 = scmp.eq.s32.totalorder %s15, 0
    %p35 = por %p33, %p34
    %p36 = scmp.ne.s32.totalorder %s25, %s28
    %p37 = scmp.eq.s32.totalorder %s20, 1
    %p38 = por %p36, %p37
    %p39 = scmp.ne.s32.totalorder %s28, %s29
    %p40 = scmp.eq.s32.totalorder %s20, 0
    %p41 = por %p39, %p40
    %p42 = scmp.ne.s32.totalorder %s28, %s29
    %p43 = scmp.eq.s32.totalorder %s21, 1
    %p44 = por %p42, %p43
    %p46 = scmp.ne.s32.totalorder %s29, %s45
    %p47 = scmp.eq.s32.totalorder %s21, 0
    %p48 = por %p46, %p47
    %s49 = ssub.s32 %s15, %s22
    %p50 = scmp.eq.s32.totalorder %s49, 0
    %s52 = sadd.s32 %s51, 1
    %s53 = scalar_select %p50, %s51, %s52
    %p56 = pneg %p50
    %p57 = scmp.eq.s32.totalorder %s15, 1
    %p58 = por %p56, %p57
    %p59 = scmp.ne.s32.totalorder %s51, %s54
    %p60 = scmp.eq.s32.totalorder %s15, 0
    %p61 = por %p59, %p60
    %p62 = scmp.ne.s32.totalorder %s51, %s54
    %p63 = scmp.eq.s32.totalorder %s20, 1
    %p64 = por %p62, %p63
    %p65 = scmp.ne.s32.totalorder %s54, %s55
    %p66 = scmp.eq.s32.totalorder %s20, 0
    %p67 = por %p65, %p66
    %p68 = scmp.ne.s32.totalorder %s54, %s55
    %p69 = scmp.eq.s32.totalorder %s21, 1
    %p70 = por %p68, %p69
    %p72 = scmp.ne.s32.totalorder %s55, %s71
    %p73 = scmp.eq.s32.totalorder %s21, 0
    %p74 = por %p72, %p73
    %s75 = ssub.s32 %s15, %s22
    %p76 = scmp.eq.s32.totalorder %s75, 0
    %s78 = sadd.s32 %s77, 1
    %s79 = scalar_select %p76, %s77, %s78
    %p82 = pneg %p76
    %p83 = scmp.eq.s32.totalorder %s15, 1
    %p84 = por %p82, %p83
    %p85 = scmp.ne.s32.totalorder %s77, %s80
    %p86 = scmp.eq.s32.totalorder %s15, 0
    %p87 = por %p85, %p86
    %p88 = scmp.ne.s32.totalorder %s77, %s80
    %p89 = scmp.eq.s32.totalorder %s20, 1
    %p90 = por %p88, %p89
    %p91 = scmp.ne.s32.totalorder %s80, %s81
    %p92 = scmp.eq.s32.totalorder %s20, 0
    %p93 = por %p91, %p92
    %p94 = scmp.ne.s32.totalorder %s80, %s81
    %p95 = scmp.eq.s32.totalorder %s21, 1
    %p96 = por %p94, %p95
    %p98 = scmp.ne.s32.totalorder %s81, %s97
    %p99 = scmp.eq.s32.totalorder %s21, 0
    %p100 = por %p98, %p99
    %p101 = scmp.le.s32.totalorder 1, %s15
    %p102 = scmp.lt.s32.totalorder %s15, 3
    %p103 = pnand %p101, %p102
    %p104 = pneg %p103
    // Predicated region
    $region9: #{_batched_chamfer_loss.1} parent=5 // pred_check
      _
    $region10: #{_batched_chamfer_loss.1} parent=5 // pred_check_branch
      %106 = sbr.rel (%p103) target = $region12
    $region11: #{_batched_chamfer_loss.1} parent=5 // pred_region
      %s107 = ssub.s32 %s15, 1
    $region12: #{_batched_chamfer_loss.1} parent=5 // pred_fallthru
      _
    %p108 = scmp.lt.s32.totalorder %s15, 2
    // Predicated region
    $region13: #{_batched_chamfer_loss.1} parent=5 // pred_check
      %p109 = pneg %p108
    $region14: #{_batched_chamfer_loss.1} parent=5 // pred_check_branch
      %111 = sbr.rel (%p109) target = $region16
    $region15: #{_batched_chamfer_loss.1} parent=5 // pred_region
      // Predicated region
      $region17: #{_batched_chamfer_loss.1} parent=15 // pred_check
        %p112 = pneg %p35
      $region18: #{_batched_chamfer_loss.1} parent=15 // pred_check_branch
        %114 = sbr.rel (%p112) target = $region20
      $region19: #{_batched_chamfer_loss.1} parent=15 // pred_region
        %p115 = scmp.lt.s32.totalorder %s15, 1
        %s116 = scalar_select %p115, %s15, 1
        %s117 = smul.addr %s116, 6
        %s118 = smul.addr %s117, 8
        %s119 = scalar_lea.vmem %s1, %s118
      $region20: #{_batched_chamfer_loss.1} parent=15 // pred_fallthru
        _
      // Predicated region
      $region21: #{_batched_chamfer_loss.1} parent=15 // pred_check
        %p120 = pneg %p61
      $region22: #{_batched_chamfer_loss.1} parent=15 // pred_check_branch
        %122 = sbr.rel (%p120) target = $region24
      $region23: #{_batched_chamfer_loss.1} parent=15 // pred_region
        %p123 = scmp.lt.s32.totalorder %s15, 1
        %s124 = scalar_select %p123, %s15, 1
        %s125 = smul.addr %s124, 8
        %s126 = scalar_lea.vmem %s2, %s125
      $region24: #{_batched_chamfer_loss.1} parent=15 // pred_fallthru
        _
    $region16: #{_batched_chamfer_loss.1} parent=5 // pred_fallthru
      _
    %p127 = scmp.le.s32.totalorder 1, %s15
    %p128 = scmp.lt.s32.totalorder %s15, 3
    %p129 = pnand %p127, %p128
    %p130 = pneg %p129
    // Predicated region
    $region25: #{_batched_chamfer_loss.1} parent=5 // pred_check
      _
    $region26: #{_batched_chamfer_loss.1} parent=5 // pred_check_branch
      %132 = sbr.rel (%p129) target = $region28
    $region27: #{_batched_chamfer_loss.1} parent=5 // pred_region
      %s133 = ssub.s32 %s15, 1
      %p134 = scmp.lt.s32.totalorder %s20, 1
      %s135 = scalar_select %p134, %s20, 1
      %s136 = smul.addr %s135, 6
      %s137 = smul.addr %s136, 8
      %s138 = scalar_lea.vmem %s1, %s137
      %p139 = pneg %p41
      %p140 = pneg %p38
      %p141 = scmp.lt.s32.totalorder %s20, 1
      %s142 = scalar_select %p141, %s20, 1
      %s143 = smul.addr %s142, 8
      %s144 = scalar_lea.vmem %s2, %s143
      %p145 = pneg %p67
      %p146 = pneg %p64
      %p147 = pneg %p93
      %p148 = pneg %p90
      %p149 = scmp.lt.s32.totalorder %s20, 1
      %s150 = scalar_select %p149, %s20, 1
      %s151 = smul.addr %s150, 8
      %s152 = scalar_lea.vmem %s3, %s151
      %p153 = scmp.lt.s32.totalorder %s20, 1
      %s154 = scalar_select %p153, %s20, 1
      %s155 = smul.addr %s154, 6
      %s156 = smul.addr %s155, 8
      %s157 = scalar_lea.vmem %s1, %s156
      %p158 = scmp.lt.s32.totalorder %s20, 1
      %s159 = scalar_select %p158, %s20, 1
      %s160 = smul.addr %s159, 8
      %s161 = scalar_lea.vmem %s2, %s160
      %p162 = scmp.lt.s32.totalorder %s20, 1
      %s163 = scalar_select %p162, %s20, 1
      %s164 = smul.addr %s163, 8
      %s165 = scalar_lea.vmem %s3, %s164
      %v166 = vlaneseq
      %v167 = vand.u32 %v166, 127
      %v168 = vlaneseq
      %v169 = vshrl.u32 %v168, 7
      %v170 = vadd.s32 %v169, 8
      %v171 = vadd.s32 %v169, 16
      %v172 = vadd.s32 %v169, 24
      %v173 = vadd.s32 %v169, 32
      %v174 = vadd.s32 %v169, 40
      %s175 = smul.u32 %s20, 128
      %s176 = sld [smem:[#allocation3 + %s175]]
      %s177 = sadd.s32 %s175, 1
      %s178 = sld [smem:[#allocation3 + %s177]]
      %v179 = vld [vmem:[%s157] sm:$0xff]
      %v180 = vld [vmem:[%s157 + $0x8] sm:$0xff]
      %v181 = vld [vmem:[%s157 + $0x10] sm:$0xff]
      %v182 = vld [vmem:[%s157 + $0x18] sm:$0xff]
      %v183 = vld [vmem:[%s157 + $0x20] sm:$0xff]
      %v184 = vld [vmem:[%s157 + $0x28] sm:$0xff]
      %v185 = vld [vmem:[%s161] sm:$0xff]
      %vm186 = vcmask 64512
      %v188 = vsel %vm186, %v179, 0
      %v191 = vsel %vm186, %v180, 0
      %v194 = vsel %vm186, %v181, 0
      %v197 = vsel %vm186, %v182, 0
      %v200 = vsel %vm186, %v183, 0
      %v203 = vsel %vm186, %v184, 0
      %205 = vmatprep.subr.mxu0 0.0
      %206 = vmatpush1.msra.mxu0 %v185
      %207 = vmatprep.subr.mxu0 0.0
      %208 = vmatpush1.msra.mxu0 0.0
      %209 = vmatprep.subr.mxu0 0.0
      %210 = vmatpush1.msra.mxu0 0.0
      %211 = vmatprep.subr.mxu0 0.0
      %212 = vmatpush1.msra.mxu0 0.0
      %213 = vmatprep.subr.mxu0 0.0
      %214 = vmatpush1.msra.mxu0 0.0
      %215 = vmatprep.subr.mxu0 0.0
      %216 = vmatpush1.msra.mxu0 0.0
      %217 = vmatprep.subr.mxu0 0.0
      %218 = vmatpush1.msra.mxu0 0.0
      %219 = vmatprep.subr.mxu0 0.0
      %220 = vmatpush1.msra.mxu0 0.0
      %221 = vmatprep.subr.mxu0 0.0
      %222 = vmatpush1.msra.mxu0 0.0
      %223 = vmatprep.subr.mxu0 0.0
      %224 = vmatpush1.msra.mxu0 0.0
      %225 = vmatprep.subr.mxu0 0.0
      %226 = vmatpush1.msra.mxu0 0.0
      %227 = vmatprep.subr.mxu0 0.0
      %228 = vmatpush1.msra.mxu0 0.0
      %229 = vmatprep.subr.mxu0 0.0
      %230 = vmatpush1.msra.mxu0 0.0
      %231 = vmatprep.subr.mxu0 0.0
      %232 = vmatpush1.msra.mxu0 0.0
      %233 = vmatprep.subr.mxu0 0.0
      %234 = vmatpush1.msra.mxu0 0.0
      %235 = vmatprep.subr.mxu0 0.0
      %236 = vmatpush1.msra.mxu0 0.0
      %237 = vmatprep.subr.mxu0 0.0
      %238 = vmatpush1.msra.mxu0 0.0
      %239 = vmatprep.subr.mxu0 0.0
      %240 = vmatpush1.msra.mxu0 0.0
      %241 = vmatprep.subr.mxu0 0.0
      %242 = vmatpush1.msra.mxu0 0.0
      %243 = vmatprep.subr.mxu0 0.0
      %244 = vmatpush1.msra.mxu0 0.0
      %245 = vmatprep.subr.mxu0 0.0
      %246 = vmatpush1.msra.mxu0 0.0
      %247 = vmatprep.subr.mxu0 0.0
      %248 = vmatpush1.msra.mxu0 0.0
      %249 = vmatprep.subr.mxu0 0.0
      %250 = vmatpush1.msra.mxu0 0.0
      %251 = vmatprep.subr.mxu0 0.0
      %252 = vmatpush1.msra.mxu0 0.0
      %253 = vmatprep.subr.mxu0 0.0
      %254 = vmatpush1.msra.mxu0 0.0
      %255 = vmatprep.subr.mxu0 0.0
      %256 = vmatpush1.msra.mxu0 0.0
      %257 = vmatprep.subr.mxu0 0.0
      %258 = vmatpush1.msra.mxu0 0.0
      %259 = vmatprep.subr.mxu0 0.0
      %260 = vmatpush1.msra.mxu0 0.0
      %261 = vmatprep.subr.mxu0 0.0
      %262 = vmatpush1.msra.mxu0 0.0
      %263 = vmatprep.subr.mxu0 0.0
      %264 = vmatpush1.msra.mxu0 0.0
      %265 = vmatprep.subr.mxu0 0.0
      %266 = vmatpush1.msra.mxu0 0.0
      %267 = vmatprep.subr.mxu0 0.0
      %268 = vmatpush1.msra.mxu0 0.0
      %269 = vmatprep.mubr.f32.mxu0 0.0
      %270 = vmatmul.mubr.f32.gmra.mrb[0].mxu0 %v188
      %v271 = vpop.f32.mrb[0].mxu0
      %v272 = vadd.f32 0.0, %v271
      %v273 = vpop.f32.mrb[0].mxu0
      %274 = vmatprep.mubr.f32.mxu0 0.0
      %275 = vmatmul.mubr.f32.gmra.mrb[0].mxu0 %v191
      %v276 = vpop.f32.mrb[0].mxu0
      %v277 = vadd.f32 0.0, %v276
      %v278 = vpop.f32.mrb[0].mxu0
      %279 = vmatprep.mubr.f32.mxu0 0.0
      %280 = vmatmul.mubr.f32.gmra.mrb[0].mxu0 %v194
      %v281 = vpop.f32.mrb[0].mxu0
      %v282 = vadd.f32 0.0, %v281
      %v283 = vpop.f32.mrb[0].mxu0
      %284 = vmatprep.mubr.f32.mxu0 0.0
      %285 = vmatmul.mubr.f32.gmra.mrb[0].mxu0 %v197
      %v286 = vpop.f32.mrb[0].mxu0
      %v287 = vadd.f32 0.0, %v286
      %v288 = vpop.f32.mrb[0].mxu0
      %289 = vmatprep.mubr.f32.mxu0 0.0
      %290 = vmatmul.mubr.f32.gmra.mrb[0].mxu0 %v200
      %v291 = vpop.f32.mrb[0].mxu0
      %v292 = vadd.f32 0.0, %v291
      %v293 = vpop.f32.mrb[0].mxu0
      %294 = vmatprep.mubr.f32.mxu0 0.0
      %295 = vmatmul.mubr.f32.gmra.mrb[0].mxu0 %v203
      %v296 = vpop.f32.mrb[0].mxu0
      %v297 = vadd.f32 0.0, %v296
      %v298 = vpop.f32.mrb[0].mxu0
      %299 = vdwg.mxu0
      %v300 = vmax.f32 %v272, 0.0
      %v301 = vmax.f32 %v277, 0.0
      %v302 = vmax.f32 %v282, 0.0
      %v303 = vmax.f32 %v287, 0.0
      %v304 = vmax.f32 %v292, 0.0
      %v305 = vmax.f32 %v297, 0.0
      %306 = vmin.xlane.f32.xlu0 %v300
      %v307 = vpop.xlane.xlu0 %306
      %308 = vmin.xlane.f32.xlu0 %v301
      %v309 = vpop.xlane.xlu0 %308
      %310 = vmin.xlane.f32.xlu0 %v302
      %v311 = vpop.xlane.xlu0 %310
      %312 = vmin.xlane.f32.xlu0 %v303
      %v313 = vpop.xlane.xlu0 %312
      %314 = vmin.xlane.f32.xlu0 %v304
      %v315 = vpop.xlane.xlu0 %314
      %316 = vmin.xlane.f32.xlu0 %v305
      %v317 = vpop.xlane.xlu0 %316
      %v318 = vmin.f32 %v300, %v304
      %v319 = vmin.f32 %v301, %v305
      %v320 = vmin.f32 %v318, %v319
      %v321 = vmin.f32 %v302, %v303
      %v322 = vmin.f32 %v320, %v321
      %v323 = vrot.slane %v322, 4
      %v324 = vmin.f32 %v322, %v323
      %v325 = vrot.slane %v324, 2
      %v326 = vmin.f32 %v324, %v325
      %v327 = vrot.slane %v326, 1
      %v328 = vmin.f32 %v326, %v327
      %v329 = vstv %s176
      %vm330 = vcmp.lt.s32.totalorder %v169, %v329
      %vm331 = vcmp.lt.s32.totalorder %v170, %v329
      %vm332 = vcmp.lt.s32.totalorder %v171, %v329
      %vm333 = vcmp.lt.s32.totalorder %v172, %v329
      %vm334 = vcmp.lt.s32.totalorder %v173, %v329
      %vm335 = vcmp.lt.s32.totalorder %v174, %v329
      %v336 = vrsqrt.pop %v307
      %v337 = vmul.f32 %v307, %v336
      %vm338 = vcmp.eq.f32.partialorder %v307, inf
      %v339 = vsel %vm338, %v307, %v337
      %vm340 = vcmp.eq.f32.partialorder %v307, 0.0
      %v341 = vand.u32 %v307, 2147483648
      %v342 = vsel %vm340, %v341, %v339
      %v343 = vrsqrt.pop %v309
      %v344 = vmul.f32 %v309, %v343
      %vm345 = vcmp.eq.f32.partialorder %v309, inf
      %v346 = vsel %vm345, %v309, %v344
      %vm347 = vcmp.eq.f32.partialorder %v309, 0.0
      %v348 = vand.u32 %v309, 2147483648
      %v349 = vsel %vm347, %v348, %v346
      %v350 = vrsqrt.pop %v311
      %v351 = vmul.f32 %v311, %v350
      %vm352 = vcmp.eq.f32.partialorder %v311, inf
      %v353 = vsel %vm352, %v311, %v351
      %vm354 = vcmp.eq.f32.partialorder %v311, 0.0
      %v355 = vand.u32 %v311, 2147483648
      %v356 = vsel %vm354, %v355, %v353
      %v357 = vrsqrt.pop %v313
      %v358 = vmul.f32 %v313, %v357
      %vm359 = vcmp.eq.f32.partialorder %v313, inf
      %v360 = vsel %vm359, %v313, %v358
      %vm361 = vcmp.eq.f32.partialorder %v313, 0.0
      %v362 = vand.u32 %v313, 2147483648
      %v363 = vsel %vm361, %v362, %v360
      %v364 = vrsqrt.pop %v315
      %v365 = vmul.f32 %v315, %v364
      %vm366 = vcmp.eq.f32.partialorder %v315, inf
      %v367 = vsel %vm366, %v315, %v365
      %vm368 = vcmp.eq.f32.partialorder %v315, 0.0
      %v369 = vand.u32 %v315, 2147483648
      %v370 = vsel %vm368, %v369, %v367
      %v371 = vrsqrt.pop %v317
      %v372 = vmul.f32 %v317, %v371
      %vm373 = vcmp.eq.f32.partialorder %v317, inf
      %v374 = vsel %vm373, %v317, %v372
      %vm375 = vcmp.eq.f32.partialorder %v317, 0.0
      %v376 = vand.u32 %v317, 2147483648
      %v377 = vsel %vm375, %v376, %v374
      %v378 = vsel %vm330, %v342, 0.0
      %v379 = vsel %vm331, %v349, 0.0
      %v380 = vsel %vm332, %v356, 0.0
      %v381 = vsel %vm333, %v363, 0.0
      %v382 = vsel %vm334, %v370, 0.0
      %v383 = vsel %vm335, %v377, 0.0
      %vm384 = vcmask 7168
      %v385 = vsel %vm384, %v378, 0.0
      %v386 = vsel %vm384, %v379, 0.0
      %v387 = vadd.f32 %v385, %v386
      %v388 = vsel %vm384, %v380, 0.0
      %v389 = vadd.f32 %v387, %v388
      %v390 = vsel %vm384, %v381, 0.0
      %v391 = vadd.f32 %v389, %v390
      %v392 = vsel %vm384, %v382, 0.0
      %v393 = vadd.f32 %v391, %v392
      %v394 = vsel %vm384, %v383, 0.0
      %v395 = vadd.f32 %v393, %v394
      %396 = vadd.xlane.f32.xlu0 %v395
      %v397 = vpop.xlane.xlu0 %396
      %v398 = vrot.slane %v397, 4
      %v399 = vadd.f32 %v397, %v398
      %v400 = vrot.slane %v399, 2
      %v401 = vadd.f32 %v399, %v400
      %v402 = vrot.slane %v401, 1
      %v403 = vadd.f32 %v401, %v402
      %s404 = vtos %v403
      %v405 = vstv %s178
      %vm406 = vcmp.lt.s32.totalorder %v167, %v405
      %v407 = vrsqrt.pop %v328
      %v408 = vmul.f32 %v328, %v407
      %vm409 = vcmp.eq.f32.partialorder %v328, inf
      %v410 = vsel %vm409, %v328, %v408
      %vm411 = vcmp.eq.f32.partialorder %v328, 0.0
      %v412 = vand.u32 %v328, 2147483648
      %v413 = vsel %vm411, %v412, %v410
      %v414 = vsel %vm406, %v413, 0.0
      %vm415 = vcmask 1040384
      %v416 = vsel %vm415, %v414, 0.0
      %417 = vadd.xlane.f32.xlu0 %v416
      %v418 = vpop.xlane.xlu0 %417
      %v419 = vrot.slane %v418, 4
      %v420 = vadd.f32 %v418, %v419
      %v421 = vrot.slane %v420, 2
      %v422 = vadd.f32 %v420, %v421
      %v423 = vrot.slane %v422, 1
      %v424 = vadd.f32 %v422, %v423
      %s425 = vtos %v424
      %p426 = scmp.gt.s32.totalorder %s176, 1
      %s427 = scalar_select %p426, %s176, 1
      %s428 = scvt.s32.f32 %s427
      %p429 = scmp.gt.s32.totalorder %s178, 1
      %s430 = scalar_select %p429, %s178, 1
      %s431 = scvt.s32.f32 %s430
      %p432 = scmp.gt.s32.totalorder %s176, 0
      %p433 = scmp.gt.s32.totalorder %s178, 0
      %p434 = pnand %p432, %p433
      %p435 = pneg %p434
      %v436 = vstv %s428
      %v437 = vrcp.pop %v436
      %s438 = vtos %v437
      %s439 = smul.f32 %s425, %s438
      %v440 = vstv %s431
      %v441 = vrcp.pop %v440
      %s442 = vtos %v441
      %s443 = smul.f32 %s404, %s442
      %s444 = sadd.f32 %s439, %s443
      %s445 = scalar_select %p435, %s444, 0.0
      %vm446 = vcmp.eq.s32.totalorder %v167, 0
      %vm447 = vcmp.eq.s32.totalorder %v169, 0
      %vm448 = vmand %vm446, %vm447
      %v449 = vstv %s445
      %v450 = vsel %vm448, %v449, 0.0
      %451 = vst [vmem:[%s165] sm:$0xff] %v450
      %p452 = scmp.lt.s32.totalorder %s20, 1
      %s453 = scalar_select %p452, %s20, 1
      %s454 = smul.addr %s453, 8
      %s455 = scalar_lea.vmem %s3, %s454
      // Predicated region
      $region29: #{_batched_chamfer_loss.1} parent=27 // pred_check
        %p456 = pneg %p90
      $region30: #{_batched_chamfer_loss.1} parent=27 // pred_check_branch
        %458 = sbr.rel (%p456) target = $region32
      $region31: #{_batched_chamfer_loss.1} parent=27 // pred_region
        _
      $region32: #{_batched_chamfer_loss.1} parent=27 // pred_fallthru
        _
    $region28: #{_batched_chamfer_loss.1} parent=5 // pred_fallthru
      _
    %p459 = scmp.le.s32.totalorder 2, %s15
    // Predicated region
    $region33: #{_batched_chamfer_loss.1} parent=5 // pred_check
      %p460 = pneg %p459
    $region34: #{_batched_chamfer_loss.1} parent=5 // pred_check_branch
      %462 = sbr.rel (%p460) target = $region36
    $region35: #{_batched_chamfer_loss.1} parent=5 // pred_region
      %s463 = ssub.s32 %s15, 2
      // Predicated region
      $region37: #{_batched_chamfer_loss.1} parent=35 // pred_check
        %p464 = pneg %p96
      $region38: #{_batched_chamfer_loss.1} parent=35 // pred_check_branch
        %466 = sbr.rel (%p464) target = $region40
      $region39: #{_batched_chamfer_loss.1} parent=35 // pred_region
        %p467 = scmp.lt.s32.totalorder %s21, 1
        %s468 = scalar_select %p467, %s21, 1
        %s469 = smul.addr %s468, 8
        %s470 = scalar_lea.vmem %s3, %s469
      $region40: #{_batched_chamfer_loss.1} parent=35 // pred_fallthru
        _
    $region36: #{_batched_chamfer_loss.1} parent=5 // pred_fallthru
      _
  $region6: #{_batched_chamfer_loss.1} parent=0 // loop_footer
    %s19 = sadd.s32 1, %s15
  $region7: #{_batched_chamfer_loss.1} parent=0 // loop_footer_branch
    %14 = sbr.rel target = $region3
  $region8: #{_batched_chamfer_loss.1} parent=0 // loop_exit
    _

</llo_original>
